<compile_context>
chip_gen: v5e
topology: v5e:2x2
jax: 0.10.0
libtpu: 0.0.40
codegen_flags: <defaults>
</compile_context>

<pallas_src>
import numpy as np
import jax
import jax.numpy as jnp
from jax.experimental import pallas as pl
from jax.experimental.pallas import tpu as pltpu

# ----------------------- irreps bookkeeping (static) ------------------------
MUL_S_IN, MUL_V_IN = 16, 8                    # input irreps: 16x0e + 8x1o
NUM_SCALARS, NUM_GATES, NUM_GATED = 8, 4, 4   # gate structure (gated are l=1)
D_IN = MUL_S_IN + 3 * MUL_V_IN                # 40
D_TP = (NUM_SCALARS + NUM_GATES) + 3 * NUM_GATED   # 24 (parent tp output)
D_OUT = NUM_SCALARS + 3 * NUM_GATED           # 20 (after gate)
GATE_ROW = 24                                 # round_up(D_OUT, 8): gate-rows offset
D_W = 2 * GATE_ROW                            # 48: stacked [act | pad | gate | pad]

# --------------------- normalize2mom constants (e3nn) -----------------------
def _normalize2mom_cst(f, n=100):
    x, w = np.polynomial.hermite.hermgauss(n)
    z = np.sqrt(2.0) * x
    m2 = np.sum(w * f(z) ** 2) / np.sqrt(np.pi)
    return float(m2 ** -0.5)

_sigmoid_np = lambda z: 1.0 / (1.0 + np.exp(-z))
CST_SILU = _normalize2mom_cst(lambda z: z * _sigmoid_np(z))   # ~1.679
CST_SIG = _normalize2mom_cst(_sigmoid_np)                     # ~1.848


# ------------------------------ Pallas kernel -------------------------------
def _tp_swish_gate_kernel(xT_ref, w_ref, b_ref, oT_ref):
    # Single merged MXU pass: y = W @ x^T + b, W = [Wa ; 0 ; Wg ; 0]  (48 x 40)
    y = jnp.dot(w_ref[...], xT_ref[...],
                preferred_element_type=jnp.float32) + b_ref[...]   # (48, tile)
    ya = y[0:D_OUT, :]                        # rows  0..19: activation pre (scaled)
    yg = y[GATE_ROW:GATE_ROW + D_OUT, :]      # rows 24..43: gate pre (sublane-aligned)
    # rows 0..7 : CST_SILU*s * sigmoid(s)            (normalized SiLU)
    # rows 8..19: CST_SIG*gated * sigmoid(gate_pre)  (normalized sigmoid gate)
    oT_ref[...] = (ya * jax.nn.sigmoid(yg)).astype(oT_ref.dtype)


def _round_up(a, b):
    return (a + b - 1) // b * b


def o3_tensor_product_swish_gate(x_t, w, b, *, max_tile=16384):
    """Lane-dense forward:  x^T (D_IN, N)  ->  out^T (D_OUT, N).

    The node dimension N lives on the lane axis everywhere; no HBM transposes
    or padding are performed (ragged last grid block handled by masked DMA).
    w: (48, D_IN) merged [Wa ; 0 ; Wg ; 0];  b: (48, 1) merged biases.
    """
    d_in, n = x_t.shape
    assert d_in == D_IN
    max_tile = max(128, (int(max_tile) // 128) * 128)
    # >= 2 grid steps whenever N allows (megacore sharding on v7x), tile % 128 == 0
    tile = min(max_tile, max(128, _round_up(pl.cdiv(n, 2), 128)))
    assert tile % 128 == 0
    grid = pl.cdiv(n, tile)

    isz = x_t.dtype.itemsize
    cost = pl.CostEstimate(
        flops=2 * n * D_IN * D_W,
        transcendentals=n * D_OUT,
        bytes_accessed=isz * n * (D_IN + D_OUT) + 4 * D_W * (D_IN + 1),
    )

    return pl.pallas_call(
        _tp_swish_gate_kernel,
        out_shape=jax.ShapeDtypeStruct((D_OUT, n), x_t.dtype),
        grid_spec=pltpu.PrefetchScalarGridSpec(
            num_scalar_prefetch=0,
            grid=(grid,),
            in_specs=[
                pl.BlockSpec((D_IN, tile), lambda i: (0, i)),   # x^T tile
                pl.BlockSpec((D_W, D_IN), lambda i: (0, 0)),    # merged W (resident)
                pl.BlockSpec((D_W, 1), lambda i: (0, 0)),       # merged bias
            ],
            out_specs=pl.BlockSpec((D_OUT, tile), lambda i: (0, i)),
        ),
        compiler_params=pltpu.CompilerParams(
            dimension_semantics=("parallel",)),
        cost_estimate=cost,
    )(x_t, w, b)


# ------------------------- parameter construction ---------------------------
def init_params(key):
    """Deterministic init matching O3TensorProduct.tensor_product_init, then
    fold the gate structure + normalize2mom constants into ONE merged
    (48, 40) weight and (48, 1) bias for the single-matmul kernel."""
    k0, k1, kb = jax.random.split(key, 3)
    # scalar path: 16x0e (x) 1x0e -> 12x0e, fan_in = 16
    sqrt_k0 = 1.0 / np.sqrt(MUL_S_IN * 1)
    w0 = jax.random.uniform(k0, (MUL_S_IN, NUM_SCALARS + NUM_GATES),
                            minval=-sqrt_k0, maxval=sqrt_k0, dtype=jnp.float32)
    # vector path: 8x1o (x) 1x0e -> 4x1o, fan_in = 8
    sqrt_k1 = 1.0 / np.sqrt(MUL_V_IN * 1)
    w1 = jax.random.uniform(k1, (MUL_V_IN, NUM_GATED),
                            minval=-sqrt_k1, maxval=sqrt_k1, dtype=jnp.float32)
    # bias only on the 0e output slice
    bias = jax.random.uniform(kb, (NUM_SCALARS + NUM_GATES,),
                              minval=-sqrt_k0, maxval=sqrt_k0, dtype=jnp.float32)

    # Full block-structured channel-mixing matrix (D_IN, D_TP), e3nn layout:
    #   scalar block w0 on [:16, :12]; vector block w1 (x) I_3 on [16:, 12:]
    w_full = jnp.zeros((D_IN, D_TP), jnp.float32)
    w_full = w_full.at[:MUL_S_IN, :NUM_SCALARS + NUM_GATES].set(w0)
    w1_exp = jnp.einsum("uw,mk->umwk", w1, jnp.eye(3, dtype=jnp.float32))
    w1_exp = w1_exp.reshape(3 * MUL_V_IN, 3 * NUM_GATED)
    w_full = w_full.at[MUL_S_IN:, NUM_SCALARS + NUM_GATES:].set(w1_exp)

    # ---- fold into one merged lane-dense operand ---------------------------
    # rows  0..19: activation path  [CST_SILU*scalar rows | CST_SIG*gated-vector rows]
    # rows 20..23: zero pad (keeps gate block at sublane-aligned offset 24)
    # rows 24..43: gate pre-activation [scalar rows | gate rows repeated 3x per comp]
    # rows 44..47: zero pad
    a_cols = np.concatenate([np.arange(NUM_SCALARS),
                             NUM_SCALARS + NUM_GATES + np.arange(3 * NUM_GATED)])
    g_cols = np.concatenate([np.arange(NUM_SCALARS),
                             NUM_SCALARS + np.repeat(np.arange(NUM_GATES), 3)])
    cst = np.concatenate([np.full(NUM_SCALARS, CST_SILU, np.float32),
                          np.full(3 * NUM_GATED, CST_SIG, np.float32)])

    wa_t = w_full[:, a_cols].T * jnp.asarray(cst)[:, None]        # (20, 40)
    wg_t = w_full[:, g_cols].T                                     # (20, 40)
    ba = jnp.concatenate([CST_SILU * bias[:NUM_SCALARS],
                          jnp.zeros((3 * NUM_GATED,), jnp.float32)])
    bg = jnp.concatenate([bias[:NUM_SCALARS],
                          jnp.repeat(bias[NUM_SCALARS:], 3)])

    w = jnp.zeros((D_W, D_IN), jnp.float32)
    w = w.at[0:D_OUT].set(wa_t).at[GATE_ROW:GATE_ROW + D_OUT].set(wg_t)
    b = jnp.zeros((D_W, 1), jnp.float32)
    b = b.at[0:D_OUT, 0].set(ba).at[GATE_ROW:GATE_ROW + D_OUT, 0].set(bg)
    return w0, w1, bias, w, b


# -------------------------- pure-JAX reference ------------------------------
def ref_forward(x, w0, w1, bias):
    """x: (N, D_IN) row-major (reference / test harness only)."""
    s_in = x[:, :MUL_S_IN]
    v_in = x[:, MUL_S_IN:].reshape(-1, MUL_V_IN, 3)
    y_s = s_in @ w0 + bias                            # (N, 12)
    y_v = jnp.einsum("num,uw->nwm", v_in, w1)         # (N, 4, 3)
    scal, gate = y_s[:, :NUM_SCALARS], y_s[:, NUM_SCALARS:]
    z_s = CST_SILU * jax.nn.silu(scal)
    g = CST_SIG * jax.nn.sigmoid(gate)
    z_v = (y_v * g[:, :, None]).reshape(-1, 3 * NUM_GATED)
    return jnp.concatenate([z_s, z_v], axis=-1)


if __name__ == "__main__":
    key = jax.random.PRNGKey(0)
    kx, kp = jax.random.split(key)

    # Node count deliberately NOT a multiple of 128 (exercises the ragged
    # last grid block — no padding anywhere in the wrapper).
    N = 1000
    # Upstream layout contract: node features arrive already lane-dense as
    # x^T (D_IN, N); no HBM transpose/pad is performed by the wrapper.
    x_t = jax.random.normal(kx, (D_IN, N), dtype=jnp.float32)

    w0, w1, bias, w, b = init_params(kp)

    out_t = o3_tensor_product_swish_gate(x_t, w, b)
    out_t = jax.block_until_ready(out_t)
    assert out_t.shape == (D_OUT, N)

    # Reference in row-major layout (the .T here is test-harness only).
    ref = jax.block_until_ready(ref_forward(x_t.T, w0, w1, bias))
    np.testing.assert_allclose(np.asarray(out_t).T, np.asarray(ref),
                               rtol=1e-4, atol=1e-5)

    # TODO(synk): the irreps_in2-provided path (general CG contractions with
    # l2 > 0) is not implemented; only the default data_in2=None ('1x0e') path
    # used by this module's forward signature is covered.  The claim that
    # e3nn's 'component' normalization cancels the sqrt_k correction is
    # validated only against this in-file reference, not e3nn itself.
    print("KERNEL_OK")
</pallas_src>

<mosaic_0001>
module attributes {stable_mosaic.version = 11 : i64} {
  func.func @_tp_swish_gate_kernel(%arg0: i32, %arg1: memref<40x512xf32, #tpu.memory_space<vmem>>, %arg2: memref<48x40xf32, #tpu.memory_space<vmem>>, %arg3: memref<48x1xf32, #tpu.memory_space<vmem>>, %arg4: memref<20x512xf32, #tpu.memory_space<vmem>>) attributes {dimension_semantics = [#tpu.dimension_semantics<parallel>], iteration_bounds = array<i64: 2>, scalar_prefetch = 0 : i64, scratch_operands = 0 : i64, tpu.core_type = #tpu.core_type<tc>, window_params = [{transform_indices = @transform_0, window_bounds = array<i64: 40, 512>}, {pipeline_mode = #tpu.pipeline_mode<synchronous>, transform_indices = @transform_1, window_bounds = array<i64: 48, 40>}, {pipeline_mode = #tpu.pipeline_mode<synchronous>, transform_indices = @transform_2, window_bounds = array<i64: 48, 1>}, {transform_indices = @transform_3, window_bounds = array<i64: 20, 512>}]} {
    %c0 = arith.constant 0 : index
    %c0_0 = arith.constant 0 : index
    %0 = vector.load %arg2[%c0, %c0_0] : memref<48x40xf32, #tpu.memory_space<vmem>>, vector<48x40xf32>
    %c0_1 = arith.constant 0 : index
    %c0_2 = arith.constant 0 : index
    %1 = vector.load %arg1[%c0_1, %c0_2] : memref<40x512xf32, #tpu.memory_space<vmem>>, vector<40x512xf32>
    %cst = arith.constant dense<0.000000e+00> : vector<48x512xf32>
    %2 = tpu.matmul %0, %1, %cst {dimension_numbers = #tpu.dot_dimension_numbers<[1], [0], [0], [1], [0, 0, 1, 1], [], []>} : vector<48x40xf32>, vector<40x512xf32>, vector<48x512xf32> -> vector<48x512xf32>
    %c0_3 = arith.constant 0 : index
    %c0_4 = arith.constant 0 : index
    %3 = vector.load %arg3[%c0_3, %c0_4] : memref<48x1xf32, #tpu.memory_space<vmem>>, vector<48x1xf32>
    %4 = vector.broadcast %3 : vector<48x1xf32> to vector<48x512xf32>
    %5 = arith.addf %2, %4 : vector<48x512xf32>
    %6 = vector.extract_strided_slice %5 {offsets = [0, 0], sizes = [20, 512], strides = [1, 1]} : vector<48x512xf32> to vector<20x512xf32>
    %7 = vector.extract_strided_slice %5 {offsets = [24, 0], sizes = [20, 512], strides = [1, 1]} : vector<48x512xf32> to vector<20x512xf32>
    %8 = arith.negf %7 : vector<20x512xf32>
    %9 = math.exp %8 : vector<20x512xf32>
    %cst_5 = arith.constant 1.000000e+00 : f32
    %10 = vector.broadcast %cst_5 : f32 to vector<20x512xf32>
    %11 = arith.addf %10, %9 : vector<20x512xf32>
    %12 = arith.divf %10, %11 : vector<20x512xf32>
    %13 = arith.mulf %6, %12 : vector<20x512xf32>
    %c0_6 = arith.constant 0 : index
    %c0_7 = arith.constant 0 : index
    %14 = vector.load %arg4[%c0_6, %c0_7] : memref<20x512xf32, #tpu.memory_space<vmem>>, vector<20x512xf32>
    tpu.vector_store %arg4[%c0_6, %c0_7], %13 {strides = array<i32>} : memref<20x512xf32, #tpu.memory_space<vmem>>, vector<20x512xf32>,
    return
  }
  func.func @transform_0(%arg0: i32) -> (i32, i32) {
    %c0_i32 = arith.constant 0 : i32
    %c0_i32_0 = arith.constant 0 : i32
    return %c0_i32, %arg0 : i32, i32
  }
  func.func @transform_1(%arg0: i32) -> (i32, i32) {
    %c0_i32 = arith.constant 0 : i32
    %c0_i32_0 = arith.constant 0 : i32
    %c0_i32_1 = arith.constant 0 : i32
    return %c0_i32, %c0_i32_0 : i32, i32
  }
  func.func @transform_2(%arg0: i32) -> (i32, i32) {
    %c0_i32 = arith.constant 0 : i32
    %c0_i32_0 = arith.constant 0 : i32
    %c0_i32_1 = arith.constant 0 : i32
    return %c0_i32, %c0_i32_0 : i32, i32
  }
  func.func @transform_3(%arg0: i32) -> (i32, i32) {
    %c0_i32 = arith.constant 0 : i32
    %c0_i32_0 = arith.constant 0 : i32
    return %c0_i32, %arg0 : i32, i32
  }
}

</mosaic_0001>

<llo_original>
// kernel: tpu_custom_call.1
$region0: #{tpu_custom_call.1}
  #allocation0 [shape = 'u32[]', space=smem, size = 0x4, offset = 0x4, fixed_abs, tag = 'smem constant byte address 0x4 - core index']
  #allocation1 [shape = 'u32[72,128]{1,0:T(1,128)}', space=vmem, size = 0x9000, scoped, tag = 'internal scratch']
  %s0 = inlined_call_operand.hbm [shape: f32[40,1000], index: 0, kind: input, shape index: {}]
  %s1 = inlined_call_operand.vmem [shape: f32[48,40], index: 1, kind: input, shape index: {}]
  %s2 = inlined_call_operand.vmem [shape: f32[48,1], index: 2, kind: input, shape index: {}]
  %s3 = inlined_call_operand.hbm [shape: f32[20,1000], index: 3, kind: output, shape index: {}]
  %s4 = sld [smem:[#allocation0]]
  $region49: #{tpu_custom_call.1} parent=0
    _
  %s6 = ssub.s32 1, %s4
  %s7 = scalar_select 0, %s6, %s4
  $region1: #{tpu_custom_call.1} parent=0
    #allocation2 [shape = 'u8[163840]{0}', space=vmem, size = 0x28000, scoped, tag = 'input window, operand 0']
    #allocation3 [shape = 's32[2]{0}', space=sflag, size = 0x8, scoped, tag = 'scoped memory for tpu_custom_call.1']
    #allocation4 [shape = 's32[2]{0}', space=sflag, size = 0x8, scoped, tag = 'scoped memory for tpu_custom_call.1']
    #allocation5 [shape = 'u8[98304]{0}', space=vmem, size = 0x18000, scoped, tag = 'output window, operand 0']
    %8 = vsyncpa [#allocation3], 0
    %s9 = scalar_lea.sflag [#allocation3], 1
    %10 = vsyncpa %s9, 0
    %11 = vsyncpa [#allocation4], 0
    %s12 = scalar_lea.sflag [#allocation4], 1
    %13 = vsyncpa %s12, 0
    loop: start=0, step=1, limit=4
    $region2: #{tpu_custom_call.1} parent=1 // loop_pre_header
      _
    $region3: #{tpu_custom_call.1} parent=1 // loop_header
      %s15 = sphi 0, %s19
      %p16 = scmp.ge.s32.totalorder %s15, 4
      %s25 = sphi 0, %s27
      %s28 = sphi 0, %s25
      %s29 = sphi 0, %s28
      %s45 = sphi 0, %s29
      %s49 = sphi 0, %s49
      %s51 = sphi 0, %s49
      %s52 = sphi 0, %s51
      %s66 = sphi 0, %s52
      %s70 = sphi 0, %s70
      %s72 = sphi 0, %s70
      %s73 = sphi 0, %s72
      %s87 = sphi 0, %s73
      %s93 = sphi 0, %s95
      %s96 = sphi 0, %s93
      %s97 = sphi 0, %s96
      %s113 = sphi 0, %s97
    $region4: #{tpu_custom_call.1} parent=1 // loop_header_branch
      %18 = sbr.rel (%p16) target = $region8
    $region5: #{tpu_custom_call.1} parent=1 // loop_body
      %s20 = ssub.s32 %s15, 1
      %s21 = ssub.s32 %s15, 2
      %s22 = sadd.s32 %s15, 1
      %s23 = ssub.s32 %s15, %s22
      %p24 = scmp.eq.s32.totalorder %s23, 0
      %s26 = sadd.s32 %s25, 1
      %s27 = scalar_select %p24, %s25, %s26
      %p30 = pneg %p24
      %p31 = scmp.eq.s32.totalorder %s15, 1
      %p32 = por %p30, %p31
      %p33 = scmp.ne.s32.totalorder %s25, %s28
      %p34 = scmp.eq.s32.totalorder %s15, 0
      %p35 = por %p33, %p34
      %p36 = scmp.ne.s32.totalorder %s25, %s28
      %p37 = scmp.eq.s32.totalorder %s20, 1
      %p38 = por %p36, %p37
      %p39 = scmp.ne.s32.totalorder %s28, %s29
      %p40 = scmp.eq.s32.totalorder %s20, 0
      %p41 = por %p39, %p40
      %p42 = scmp.ne.s32.totalorder %s28, %s29
      %p43 = scmp.eq.s32.totalorder %s21, 1
      %p44 = por %p42, %p43
      %p46 = scmp.ne.s32.totalorder %s29, %s45
      %p47 = scmp.eq.s32.totalorder %s21, 0
      %p48 = por %p46, %p47
      %s50 = sadd.s32 %s49, 1
      %p53 = scmp.eq.s32.totalorder %s15, 1
      %p54 = scmp.ne.s32.totalorder %s49, %s51
      %p55 = scmp.eq.s32.totalorder %s15, 0
      %p56 = por %p54, %p55
      %p57 = scmp.ne.s32.totalorder %s49, %s51
      %p58 = scmp.eq.s32.totalorder %s20, 1
      %p59 = por %p57, %p58
      %p60 = scmp.ne.s32.totalorder %s51, %s52
      %p61 = scmp.eq.s32.totalorder %s20, 0
      %p62 = por %p60, %p61
      %p63 = scmp.ne.s32.totalorder %s51, %s52
      %p64 = scmp.eq.s32.totalorder %s21, 1
      %p65 = por %p63, %p64
      %p67 = scmp.ne.s32.totalorder %s52, %s66
      %p68 = scmp.eq.s32.totalorder %s21, 0
      %p69 = por %p67, %p68
      %s71 = sadd.s32 %s70, 1
      %p74 = scmp.eq.s32.totalorder %s15, 1
      %p75 = scmp.ne.s32.totalorder %s70, %s72
      %p76 = scmp.eq.s32.totalorder %s15, 0
      %p77 = por %p75, %p76
      %p78 = scmp.ne.s32.totalorder %s70, %s72
      %p79 = scmp.eq.s32.totalorder %s20, 1
      %p80 = por %p78, %p79
      %p81 = scmp.ne.s32.totalorder %s72, %s73
      %p82 = scmp.eq.s32.totalorder %s20, 0
      %p83 = por %p81, %p82
      %p84 = scmp.ne.s32.totalorder %s72, %s73
      %p85 = scmp.eq.s32.totalorder %s21, 1
      %p86 = por %p84, %p85
      %p88 = scmp.ne.s32.totalorder %s73, %s87
      %p89 = scmp.eq.s32.totalorder %s21, 0
      %p90 = por %p88, %p89
      %s91 = ssub.s32 %s15, %s22
      %p92 = scmp.eq.s32.totalorder %s91, 0
      %s94 = sadd.s32 %s93, 1
      %s95 = scalar_select %p92, %s93, %s94
      %p98 = pneg %p92
      %p99 = scmp.eq.s32.totalorder %s15, 1
      %p100 = por %p98, %p99
      %p101 = scmp.ne.s32.totalorder %s93, %s96
      %p102 = scmp.eq.s32.totalorder %s15, 0
      %p103 = por %p101, %p102
      %p104 = scmp.ne.s32.totalorder %s93, %s96
      %p105 = scmp.eq.s32.totalorder %s20, 1
      %p106 = por %p104, %p105
      %p107 = scmp.ne.s32.totalorder %s96, %s97
      %p108 = scmp.eq.s32.totalorder %s20, 0
      %p109 = por %p107, %p108
      %p110 = scmp.ne.s32.totalorder %s96, %s97
      %p111 = scmp.eq.s32.totalorder %s21, 1
      %p112 = por %p110, %p111
      %p114 = scmp.ne.s32.totalorder %s97, %s113
      %p115 = scmp.eq.s32.totalorder %s21, 0
      %p116 = por %p114, %p115
      %p117 = scmp.le.s32.totalorder 1, %s15
      %p118 = scmp.lt.s32.totalorder %s15, 3
      %p119 = pnand %p117, %p118
      %p120 = pneg %p119
      // Predicated region
      $region9: #{tpu_custom_call.1} parent=5 // pred_check
        _
      $region10: #{tpu_custom_call.1} parent=5 // pred_check_branch
        %122 = sbr.rel (%p119) target = $region12
      $region11: #{tpu_custom_call.1} parent=5 // pred_region
        %s123 = ssub.s32 %s15, 1
        // Predicated region
        $region13: #{tpu_custom_call.1} parent=11 // pred_check
          %p124 = pneg %p62
        $region14: #{tpu_custom_call.1} parent=11 // pred_check_branch
          %126 = sbr.rel (%p124) target = $region16
        $region15: #{tpu_custom_call.1} parent=11 // pred_region
          _
        $region16: #{tpu_custom_call.1} parent=11 // pred_fallthru
          _
        // Predicated region
        $region17: #{tpu_custom_call.1} parent=11 // pred_check
          %p127 = pneg %p83
        $region18: #{tpu_custom_call.1} parent=11 // pred_check_branch
          %129 = sbr.rel (%p127) target = $region20
        $region19: #{tpu_custom_call.1} parent=11 // pred_region
          _
        $region20: #{tpu_custom_call.1} parent=11 // pred_fallthru
          _
      $region12: #{tpu_custom_call.1} parent=5 // pred_fallthru
        _
      %p130 = scmp.lt.s32.totalorder %s15, 2
      // Predicated region
      $region21: #{tpu_custom_call.1} parent=5 // pred_check
        %p131 = pneg %p130
      $region22: #{tpu_custom_call.1} parent=5 // pred_check_branch
        %133 = sbr.rel (%p131) target = $region24
      $region23: #{tpu_custom_call.1} parent=5 // pred_region
        // Predicated region
        $region25: #{tpu_custom_call.1} parent=23 // pred_check
          %p134 = pneg %p35
        $region26: #{tpu_custom_call.1} parent=23 // pred_check_branch
          %136 = sbr.rel (%p134) target = $region28
        $region27: #{tpu_custom_call.1} parent=23 // pred_region
          %s137 = sand.u32 %s25, 1
          %s138 = scalar_lea.sflag [#allocation3], %s137
          %s139 = sand.u32 %s25, 1
          %s140 = smul.addr %s139, 160
          %s141 = scalar_lea.vmem [#allocation2], %s140
          %s142 = smul.u32 4, %s15
          %144 = vsyncadd %s138, 0
          %s145 = smul.addr %s142, 8
          %s146 = scalar_lea.hbm %s0, %s145
          %s147 = sshll.u32 %s146, 4
          %s148 = int_to_ptr.hbm [resolvable:$true] %s147
          %s149 = sshll.u32 %s141, 4
          %s150 = int_to_ptr.vmem [resolvable:$true] %s149
          %155 = dma.hbm_to_vmem [thread:$0]  %s148, 2560, %s150, %s138, 1024, 512, 32
        $region28: #{tpu_custom_call.1} parent=23 // pred_fallthru
          _
      $region24: #{tpu_custom_call.1} parent=5 // pred_fallthru
        _
      %p156 = scmp.le.s32.totalorder 1, %s15
      %p157 = scmp.lt.s32.totalorder %s15, 3
      %p158 = pnand %p156, %p157
      %p159 = pneg %p158
      // Predicated region
      $region29: #{tpu_custom_call.1} parent=5 // pred_check
        _
      $region30: #{tpu_custom_call.1} parent=5 // pred_check_branch
        %161 = sbr.rel (%p158) target = $region32
      $region31: #{tpu_custom_call.1} parent=5 // pred_region
        %s162 = ssub.s32 %s15, 1
        %s163 = sand.u32 %s28, 1
        %s164 = scalar_lea.sflag [#allocation3], %s163
        %s165 = sand.u32 %s28, 1
        %s166 = smul.addr %s165, 160
        %s167 = scalar_lea.vmem [#allocation2], %s166
        // Predicated region
        $region33: #{tpu_custom_call.1} parent=31 // pred_check
          %p168 = pneg %p41
        $region34: #{tpu_custom_call.1} parent=31 // pred_check_branch
          %170 = sbr.rel (%p168) target = $region36
        $region35: #{tpu_custom_call.1} parent=31 // pred_region
          %172 = dma.done %s164, 2560
        $region36: #{tpu_custom_call.1} parent=31 // pred_fallthru
          _
        %s173 = sand.u32 %s28, 1
        %s174 = scalar_lea.sflag [#allocation3], %s173
        %s175 = sand.u32 %s28, 1
        %s176 = smul.addr %s175, 160
        %s177 = scalar_lea.vmem [#allocation2], %s176
        %p178 = pneg %p41
        %p179 = pneg %p38
        %p180 = pneg %p62
        %p181 = pneg %p59
        %p182 = pneg %p83
        %p183 = pneg %p80
        %p184 = pneg %p109
        %p185 = pneg %p106
        %s186 = sand.u32 %s96, 1
        %s187 = scalar_lea.sflag [#allocation4], %s186
        %s188 = sand.u32 %s96, 1
        %s189 = smul.addr %s188, 96
        %s190 = scalar_lea.vmem [#allocation5], %s189
        %s191 = smul.u32 4, %s20
        %s192 = smul.u32 4, %s20
        %v193 = vld [vmem:[%s1] sm:$0xff]
        %v194 = vld [vmem:[%s1 + $0x8] sm:$0xff]
        %v195 = vld [vmem:[%s1 + $0x10] sm:$0xff]
        %v196 = vld [vmem:[%s1 + $0x18] sm:$0xff]
        %v197 = vld [vmem:[%s1 + $0x20] sm:$0xff]
        %v198 = vld [vmem:[%s1 + $0x28] sm:$0xff]
        %v199 = vld [vmem:[%s167] sm:$0xff]
        %v200 = vld [vmem:[%s167 + $0x8] sm:$0xff]
        %v201 = vld [vmem:[%s167 + $0x10] sm:$0xff]
        %v202 = vld [vmem:[%s167 + $0x18] sm:$0xff]
        %v203 = vld [vmem:[%s167 + $0x20] sm:$0xff]
        %v204 = vld [vmem:[%s167 + $0x28] sm:$0xff]
        %v205 = vld [vmem:[%s167 + $0x30] sm:$0xff]
        %v206 = vld [vmem:[%s167 + $0x38] sm:$0xff]
        %v207 = vld [vmem:[%s167 + $0x40] sm:$0xff]
        %v208 = vld [vmem:[%s167 + $0x48] sm:$0xff]
        %v209 = vld [vmem:[%s167 + $0x50] sm:$0xff]
        %v210 = vld [vmem:[%s167 + $0x58] sm:$0xff]
        %v211 = vld [vmem:[%s167 + $0x60] sm:$0xff]
        %v212 = vld [vmem:[%s167 + $0x68] sm:$0xff]
        %v213 = vld [vmem:[%s167 + $0x70] sm:$0xff]
        %v214 = vld [vmem:[%s167 + $0x78] sm:$0xff]
        %v215 = vld [vmem:[%s167 + $0x80] sm:$0xff]
        %v216 = vld [vmem:[%s167 + $0x88] sm:$0xff]
        %v217 = vld [vmem:[%s167 + $0x90] sm:$0xff]
        %v218 = vld [vmem:[%s167 + $0x98] sm:$0xff]
        %v219 = vld [vmem:[%s2] sm:$0xff]
        %v220 = vld [vmem:[%s2 + $0x8] sm:$0xff]
        %v221 = vld [vmem:[%s2 + $0x10] sm:$0xff]
        %v222 = vld [vmem:[%s2 + $0x18] sm:$0xff]
        %v223 = vld [vmem:[%s2 + $0x20] sm:$0xff]
        %v224 = vld [vmem:[%s2 + $0x28] sm:$0xff]
        %226 = vset.pattern.permute.xlu0 0
        %227 = vperm.xlu0 %226, %v219
        %v228 = vpop.permute.xlu0 %227
        %231 = vset.pattern.permute.xlu0 0
        %232 = vperm.xlu0 %231, %v220
        %v233 = vpop.permute.xlu0 %232
        %236 = vset.pattern.permute.xlu0 0
        %237 = vperm.xlu0 %236, %v221
        %v238 = vpop.permute.xlu0 %237
        %241 = vset.pattern.permute.xlu0 0
        %242 = vperm.xlu0 %241, %v222
        %v243 = vpop.permute.xlu0 %242
        %246 = vset.pattern.permute.xlu0 0
        %247 = vperm.xlu0 %246, %v223
        %v248 = vpop.permute.xlu0 %247
        %251 = vset.pattern.permute.xlu0 0
        %252 = vperm.xlu0 %251, %v224
        %v253 = vpop.permute.xlu0 %252
        %vm255 = vcmask 326656
        %v257 = vsel %vm255, %v193, 0
        %v260 = vsel %vm255, %v194, 0
        %v263 = vsel %vm255, %v195, 0
        %v266 = vsel %vm255, %v196, 0
        %v269 = vsel %vm255, %v197, 0
        %v272 = vsel %vm255, %v198, 0
        %274 = vmatpush.msra.mxu0 0.0
        %275 = vmatpush.msra.mxu0 0.0
        %276 = vmatpush.msra.mxu0 0.0
        %277 = vmatpush.msra.mxu0 0.0
        %278 = vmatpush.msra.mxu0 0.0
        %279 = vmatpush.msra.mxu0 0.0
        %280 = vmatpush.msra.mxu0 0.0
        %281 = vmatpush.msra.mxu0 0.0
        %282 = vmatpush.msra.mxu0 0.0
        %283 = vmatpush.msra.mxu0 0.0
        %284 = vmatpush.msra.mxu0 0.0
        %285 = vmatpush.msra.mxu0 %v215
        %286 = vmatpush.msra.mxu0 %v211
        %287 = vmatpush.msra.mxu0 %v207
        %288 = vmatpush.msra.mxu0 %v203
        %289 = vmatpush.msra.mxu0 %v199
        %290 = vmatmul.f32.gmra.mxu0 %v257
        %v291 = vpop.f32.mrf.mxu0
        %v292 = vadd.f32 %v228, %v291
        %293 = vmatmul.f32.gmra.mxu0 %v260
        %v294 = vpop.f32.mrf.mxu0
        %v295 = vadd.f32 %v233, %v294
        %296 = vmatmul.f32.gmra.mxu0 %v263
        %v297 = vpop.f32.mrf.mxu0
        %v298 = vadd.f32 %v238, %v297
        %299 = vmatmul.f32.gmra.mxu0 %v266
        %v300 = vpop.f32.mrf.mxu0
        %v301 = vadd.f32 %v243, %v300
        %302 = vmatmul.f32.gmra.mxu0 %v269
        %v303 = vpop.f32.mrf.mxu0
        %v304 = vadd.f32 %v248, %v303
        %305 = vmatmul.f32.gmra.mxu0 %v272
        %v306 = vpop.f32.mrf.mxu0
        %v307 = vadd.f32 %v253, %v306
        %308 = vdwg.mxu0
        %309 = vmatpush.msra.mxu0 0.0
        %310 = vmatpush.msra.mxu0 0.0
        %311 = vmatpush.msra.mxu0 0.0
        %312 = vmatpush.msra.mxu0 0.0
        %313 = vmatpush.msra.mxu0 0.0
        %314 = vmatpush.msra.mxu0 0.0
        %315 = vmatpush.msra.mxu0 0.0
        %316 = vmatpush.msra.mxu0 0.0
        %317 = vmatpush.msra.mxu0 0.0
        %318 = vmatpush.msra.mxu0 0.0
        %319 = vmatpush.msra.mxu0 0.0
        %320 = vmatpush.msra.mxu0 %v216
        %321 = vmatpush.msra.mxu0 %v212
        %322 = vmatpush.msra.mxu0 %v208
        %323 = vmatpush.msra.mxu0 %v204
        %324 = vmatpush.msra.mxu0 %v200
        %325 = vmatmul.f32.gmra.mxu0 %v257
        %v326 = vpop.f32.mrf.mxu0
        %v327 = vadd.f32 %v228, %v326
        %328 = vmatmul.f32.gmra.mxu0 %v260
        %v329 = vpop.f32.mrf.mxu0
        %v330 = vadd.f32 %v233, %v329
        %331 = vmatmul.f32.gmra.mxu0 %v263
        %v332 = vpop.f32.mrf.mxu0
        %v333 = vadd.f32 %v238, %v332
        %334 = vmatmul.f32.gmra.mxu0 %v266
        %v335 = vpop.f32.mrf.mxu0
        %v336 = vadd.f32 %v243, %v335
        %337 = vmatmul.f32.gmra.mxu0 %v269
        %v338 = vpop.f32.mrf.mxu0
        %v339 = vadd.f32 %v248, %v338
        %340 = vmatmul.f32.gmra.mxu0 %v272
        %v341 = vpop.f32.mrf.mxu0
        %v342 = vadd.f32 %v253, %v341
        %343 = vdwg.mxu0
        %344 = vmatpush.msra.mxu0 0.0
        %345 = vmatpush.msra.mxu0 0.0
        %346 = vmatpush.msra.mxu0 0.0
        %347 = vmatpush.msra.mxu0 0.0
        %348 = vmatpush.msra.mxu0 0.0
        %349 = vmatpush.msra.mxu0 0.0
        %350 = vmatpush.msra.mxu0 0.0
        %351 = vmatpush.msra.mxu0 0.0
        %352 = vmatpush.msra.mxu0 0.0
        %353 = vmatpush.msra.mxu0 0.0
        %354 = vmatpush.msra.mxu0 0.0
        %355 = vmatpush.msra.mxu0 %v217
        %356 = vmatpush.msra.mxu0 %v213
        %357 = vmatpush.msra.mxu0 %v209
        %358 = vmatpush.msra.mxu0 %v205
        %359 = vmatpush.msra.mxu0 %v201
        %360 = vmatmul.f32.gmra.mxu0 %v257
        %v361 = vpop.f32.mrf.mxu0
        %v362 = vadd.f32 %v228, %v361
        %363 = vmatmul.f32.gmra.mxu0 %v260
        %v364 = vpop.f32.mrf.mxu0
        %v365 = vadd.f32 %v233, %v364
        %366 = vmatmul.f32.gmra.mxu0 %v263
        %v367 = vpop.f32.mrf.mxu0
        %v368 = vadd.f32 %v238, %v367
        %369 = vmatmul.f32.gmra.mxu0 %v266
        %v370 = vpop.f32.mrf.mxu0
        %v371 = vadd.f32 %v243, %v370
        %372 = vmatmul.f32.gmra.mxu0 %v269
        %v373 = vpop.f32.mrf.mxu0
        %v374 = vadd.f32 %v248, %v373
        %375 = vmatmul.f32.gmra.mxu0 %v272
        %v376 = vpop.f32.mrf.mxu0
        %v377 = vadd.f32 %v253, %v376
        %378 = vdwg.mxu0
        %379 = vmatpush.msra.mxu0 0.0
        %380 = vmatpush.msra.mxu0 0.0
        %381 = vmatpush.msra.mxu0 0.0
        %382 = vmatpush.msra.mxu0 0.0
        %383 = vmatpush.msra.mxu0 0.0
        %384 = vmatpush.msra.mxu0 0.0
        %385 = vmatpush.msra.mxu0 0.0
        %386 = vmatpush.msra.mxu0 0.0
        %387 = vmatpush.msra.mxu0 0.0
        %388 = vmatpush.msra.mxu0 0.0
        %389 = vmatpush.msra.mxu0 0.0
        %390 = vmatpush.msra.mxu0 %v218
        %391 = vmatpush.msra.mxu0 %v214
        %392 = vmatpush.msra.mxu0 %v210
        %393 = vmatpush.msra.mxu0 %v206
        %394 = vmatpush.msra.mxu0 %v202
        %395 = vmatmul.f32.gmra.mxu0 %v257
        %v396 = vpop.f32.mrf.mxu0
        %v397 = vadd.f32 %v228, %v396
        %398 = vmatmul.f32.gmra.mxu0 %v260
        %v399 = vpop.f32.mrf.mxu0
        %v400 = vadd.f32 %v233, %v399
        %401 = vmatmul.f32.gmra.mxu0 %v263
        %v402 = vpop.f32.mrf.mxu0
        %v403 = vadd.f32 %v238, %v402
        %404 = vmatmul.f32.gmra.mxu0 %v266
        %v405 = vpop.f32.mrf.mxu0
        %v406 = vadd.f32 %v243, %v405
        %407 = vmatmul.f32.gmra.mxu0 %v269
        %v408 = vpop.f32.mrf.mxu0
        %v409 = vadd.f32 %v248, %v408
        %410 = vmatmul.f32.gmra.mxu0 %v272
        %v411 = vpop.f32.mrf.mxu0
        %v412 = vadd.f32 %v253, %v411
        %413 = vdwg.mxu0
        %v414 = vxor.u32 %v301, 2147483648
        %v415 = vxor.u32 %v336, 2147483648
        %v416 = vxor.u32 %v371, 2147483648
        %v417 = vxor.u32 %v406, 2147483648
        %v418 = vxor.u32 %v304, 2147483648
        %v419 = vxor.u32 %v339, 2147483648
        %v420 = vxor.u32 %v374, 2147483648
        %v421 = vxor.u32 %v409, 2147483648
        %v422 = vxor.u32 %v307, 2147483648
        %v423 = vxor.u32 %v342, 2147483648
        %v424 = vxor.u32 %v377, 2147483648
        %v425 = vxor.u32 %v412, 2147483648
        %v426 = vmul.f32 %v414, 1.442695
        %v427 = vpow.pop %v426
        %v428 = vmul.f32 %v415, 1.442695
        %v429 = vpow.pop %v428
        %v430 = vmul.f32 %v416, 1.442695
        %v431 = vpow.pop %v430
        %v432 = vmul.f32 %v417, 1.442695
        %v433 = vpow.pop %v432
        %v434 = vmul.f32 %v418, 1.442695
        %v435 = vpow.pop %v434
        %v436 = vmul.f32 %v419, 1.442695
        %v437 = vpow.pop %v436
        %v438 = vmul.f32 %v420, 1.442695
        %v439 = vpow.pop %v438
        %v440 = vmul.f32 %v421, 1.442695
        %v441 = vpow.pop %v440
        %v442 = vmul.f32 %v422, 1.442695
        %v443 = vpow.pop %v442
        %v444 = vmul.f32 %v423, 1.442695
        %v445 = vpow.pop %v444
        %v446 = vmul.f32 %v424, 1.442695
        %v447 = vpow.pop %v446
        %v448 = vmul.f32 %v425, 1.442695
        %v449 = vpow.pop %v448
        %v450 = vadd.f32 %v427, 1.0
        %v451 = vadd.f32 %v429, 1.0
        %v452 = vadd.f32 %v431, 1.0
        %v453 = vadd.f32 %v433, 1.0
        %v454 = vadd.f32 %v435, 1.0
        %v455 = vadd.f32 %v437, 1.0
        %v456 = vadd.f32 %v439, 1.0
        %v457 = vadd.f32 %v441, 1.0
        %v458 = vadd.f32 %v443, 1.0
        %v459 = vadd.f32 %v445, 1.0
        %v460 = vadd.f32 %v447, 1.0
        %v461 = vadd.f32 %v449, 1.0
        %v462 = vrcp.pop %v450
        %v463 = vmul.f32 %v450, %v462
        %v464 = vsub.f32 1.0, %v463
        %v465 = vmul.f32 %v462, %v464
        %v466 = vadd.f32 %v462, %v465
        %vm467 = vweird.f32 %v450
        %vm468 = vweird.f32 %v462
        %vm469 = vmor %vm467, %vm468
        %v470 = vsel %vm469, %v462, %v466
        %v471 = vand.u32 2147483647, %v450
        %vm472 = vcmp.eq.f32.partialorder %v471, 8.507059e+37
        %v473 = vand.u32 %v450, 2147483648
        %v474 = vor.u32 1.1754944e-38, %v473
        %v475 = vsel %vm472, %v474, %v470
        %v476 = vmul.f32 1.0, %v475
        %v477 = vrcp.pop %v451
        %v478 = vmul.f32 %v451, %v477
        %v479 = vsub.f32 1.0, %v478
        %v480 = vmul.f32 %v477, %v479
        %v481 = vadd.f32 %v477, %v480
        %vm482 = vweird.f32 %v451
        %vm483 = vweird.f32 %v477
        %vm484 = vmor %vm482, %vm483
        %v485 = vsel %vm484, %v477, %v481
        %v486 = vand.u32 2147483647, %v451
        %vm487 = vcmp.eq.f32.partialorder %v486, 8.507059e+37
        %v488 = vand.u32 %v451, 2147483648
        %v489 = vor.u32 1.1754944e-38, %v488
        %v490 = vsel %vm487, %v489, %v485
        %v491 = vmul.f32 1.0, %v490
        %v492 = vrcp.pop %v452
        %v493 = vmul.f32 %v452, %v492
        %v494 = vsub.f32 1.0, %v493
        %v495 = vmul.f32 %v492, %v494
        %v496 = vadd.f32 %v492, %v495
        %vm497 = vweird.f32 %v452
        %vm498 = vweird.f32 %v492
        %vm499 = vmor %vm497, %vm498
        %v500 = vsel %vm499, %v492, %v496
        %v501 = vand.u32 2147483647, %v452
        %vm502 = vcmp.eq.f32.partialorder %v501, 8.507059e+37
        %v503 = vand.u32 %v452, 2147483648
        %v504 = vor.u32 1.1754944e-38, %v503
        %v505 = vsel %vm502, %v504, %v500
        %v506 = vmul.f32 1.0, %v505
        %v507 = vrcp.pop %v453
        %v508 = vmul.f32 %v453, %v507
        %v509 = vsub.f32 1.0, %v508
        %v510 = vmul.f32 %v507, %v509
        %v511 = vadd.f32 %v507, %v510
        %vm512 = vweird.f32 %v453
        %vm513 = vweird.f32 %v507
        %vm514 = vmor %vm512, %vm513
        %v515 = vsel %vm514, %v507, %v511
        %v516 = vand.u32 2147483647, %v453
        %vm517 = vcmp.eq.f32.partialorder %v516, 8.507059e+37
        %v518 = vand.u32 %v453, 2147483648
        %v519 = vor.u32 1.1754944e-38, %v518
        %v520 = vsel %vm517, %v519, %v515
        %v521 = vmul.f32 1.0, %v520
        %v522 = vrcp.pop %v454
        %v523 = vmul.f32 %v454, %v522
        %v524 = vsub.f32 1.0, %v523
        %v525 = vmul.f32 %v522, %v524
        %v526 = vadd.f32 %v522, %v525
        %vm527 = vweird.f32 %v454
        %vm528 = vweird.f32 %v522
        %vm529 = vmor %vm527, %vm528
        %v530 = vsel %vm529, %v522, %v526
        %v531 = vand.u32 2147483647, %v454
        %vm532 = vcmp.eq.f32.partialorder %v531, 8.507059e+37
        %v533 = vand.u32 %v454, 2147483648
        %v534 = vor.u32 1.1754944e-38, %v533
        %v535 = vsel %vm532, %v534, %v530
        %v536 = vmul.f32 1.0, %v535
        %v537 = vrcp.pop %v455
        %v538 = vmul.f32 %v455, %v537
        %v539 = vsub.f32 1.0, %v538
        %v540 = vmul.f32 %v537, %v539
        %v541 = vadd.f32 %v537, %v540
        %vm542 = vweird.f32 %v455
        %vm543 = vweird.f32 %v537
        %vm544 = vmor %vm542, %vm543
        %v545 = vsel %vm544, %v537, %v541
        %v546 = vand.u32 2147483647, %v455
        %vm547 = vcmp.eq.f32.partialorder %v546, 8.507059e+37
        %v548 = vand.u32 %v455, 2147483648
        %v549 = vor.u32 1.1754944e-38, %v548
        %v550 = vsel %vm547, %v549, %v545
        %v551 = vmul.f32 1.0, %v550
        %v552 = vrcp.pop %v456
        %v553 = vmul.f32 %v456, %v552
        %v554 = vsub.f32 1.0, %v553
        %v555 = vmul.f32 %v552, %v554
        %v556 = vadd.f32 %v552, %v555
        %vm557 = vweird.f32 %v456
        %vm558 = vweird.f32 %v552
        %vm559 = vmor %vm557, %vm558
        %v560 = vsel %vm559, %v552, %v556
        %v561 = vand.u32 2147483647, %v456
        %vm562 = vcmp.eq.f32.partialorder %v561, 8.507059e+37
        %v563 = vand.u32 %v456, 2147483648
        %v564 = vor.u32 1.1754944e-38, %v563
        %v565 = vsel %vm562, %v564, %v560
        %v566 = vmul.f32 1.0, %v565
        %v567 = vrcp.pop %v457
        %v568 = vmul.f32 %v457, %v567
        %v569 = vsub.f32 1.0, %v568
        %v570 = vmul.f32 %v567, %v569
        %v571 = vadd.f32 %v567, %v570
        %vm572 = vweird.f32 %v457
        %vm573 = vweird.f32 %v567
        %vm574 = vmor %vm572, %vm573
        %v575 = vsel %vm574, %v567, %v571
        %v576 = vand.u32 2147483647, %v457
        %vm577 = vcmp.eq.f32.partialorder %v576, 8.507059e+37
        %v578 = vand.u32 %v457, 2147483648
        %v579 = vor.u32 1.1754944e-38, %v578
        %v580 = vsel %vm577, %v579, %v575
        %v581 = vmul.f32 1.0, %v580
        %v582 = vrcp.pop %v458
        %v583 = vmul.f32 %v458, %v582
        %v584 = vsub.f32 1.0, %v583
        %v585 = vmul.f32 %v582, %v584
        %v586 = vadd.f32 %v582, %v585
        %vm587 = vweird.f32 %v458
        %vm588 = vweird.f32 %v582
        %vm589 = vmor %vm587, %vm588
        %v590 = vsel %vm589, %v582, %v586
        %v591 = vand.u32 2147483647, %v458
        %vm592 = vcmp.eq.f32.partialorder %v591, 8.507059e+37
        %v593 = vand.u32 %v458, 2147483648
        %v594 = vor.u32 1.1754944e-38, %v593
        %v595 = vsel %vm592, %v594, %v590
        %v596 = vmul.f32 1.0, %v595
        %v597 = vrcp.pop %v459
        %v598 = vmul.f32 %v459, %v597
        %v599 = vsub.f32 1.0, %v598
        %v600 = vmul.f32 %v597, %v599
        %v601 = vadd.f32 %v597, %v600
        %vm602 = vweird.f32 %v459
        %vm603 = vweird.f32 %v597
        %vm604 = vmor %vm602, %vm603
        %v605 = vsel %vm604, %v597, %v601
        %v606 = vand.u32 2147483647, %v459
        %vm607 = vcmp.eq.f32.partialorder %v606, 8.507059e+37
        %v608 = vand.u32 %v459, 2147483648
        %v609 = vor.u32 1.1754944e-38, %v608
        %v610 = vsel %vm607, %v609, %v605
        %v611 = vmul.f32 1.0, %v610
        %v612 = vrcp.pop %v460
        %v613 = vmul.f32 %v460, %v612
        %v614 = vsub.f32 1.0, %v613
        %v615 = vmul.f32 %v612, %v614
        %v616 = vadd.f32 %v612, %v615
        %vm617 = vweird.f32 %v460
        %vm618 = vweird.f32 %v612
        %vm619 = vmor %vm617, %vm618
        %v620 = vsel %vm619, %v612, %v616
        %v621 = vand.u32 2147483647, %v460
        %vm622 = vcmp.eq.f32.partialorder %v621, 8.507059e+37
        %v623 = vand.u32 %v460, 2147483648
        %v624 = vor.u32 1.1754944e-38, %v623
        %v625 = vsel %vm622, %v624, %v620
        %v626 = vmul.f32 1.0, %v625
        %v627 = vrcp.pop %v461
        %v628 = vmul.f32 %v461, %v627
        %v629 = vsub.f32 1.0, %v628
        %v630 = vmul.f32 %v627, %v629
        %v631 = vadd.f32 %v627, %v630
        %vm632 = vweird.f32 %v461
        %vm633 = vweird.f32 %v627
        %vm634 = vmor %vm632, %vm633
        %v635 = vsel %vm634, %v627, %v631
        %v636 = vand.u32 2147483647, %v461
        %vm637 = vcmp.eq.f32.partialorder %v636, 8.507059e+37
        %v638 = vand.u32 %v461, 2147483648
        %v639 = vor.u32 1.1754944e-38, %v638
        %v640 = vsel %vm637, %v639, %v635
        %v641 = vmul.f32 1.0, %v640
        %v642 = vmul.f32 %v292, %v476
        %v643 = vmul.f32 %v327, %v491
        %v644 = vmul.f32 %v362, %v506
        %v645 = vmul.f32 %v397, %v521
        %v646 = vmul.f32 %v295, %v536
        %v647 = vmul.f32 %v330, %v551
        %v648 = vmul.f32 %v365, %v566
        %v649 = vmul.f32 %v400, %v581
        %v650 = vmul.f32 %v298, %v596
        %v651 = vmul.f32 %v333, %v611
        %v652 = vmul.f32 %v368, %v626
        %v653 = vmul.f32 %v403, %v641
        %654 = vst [vmem:[%s190] sm:$0xff] %v642
        %655 = vst [vmem:[%s190 + $0x8] sm:$0xff] %v643
        %656 = vst [vmem:[%s190 + $0x10] sm:$0xff] %v644
        %657 = vst [vmem:[%s190 + $0x18] sm:$0xff] %v645
        %658 = vst [vmem:[%s190 + $0x20] sm:$0xff] %v646
        %659 = vst [vmem:[%s190 + $0x28] sm:$0xff] %v647
        %660 = vst [vmem:[%s190 + $0x30] sm:$0xff] %v648
        %661 = vst [vmem:[%s190 + $0x38] sm:$0xff] %v649
        %662 = vst [vmem:[%s190 + $0x40] sm:$0xf] %v650
        %663 = vst [vmem:[%s190 + $0x48] sm:$0xf] %v651
        %664 = vst [vmem:[%s190 + $0x50] sm:$0xf] %v652
        %665 = vst [vmem:[%s190 + $0x58] sm:$0xf] %v653
        %s666 = sand.u32 %s96, 1
        %s667 = scalar_lea.sflag [#allocation4], %s666
        %s668 = sand.u32 %s96, 1
        %s669 = smul.addr %s668, 96
        %s670 = scalar_lea.vmem [#allocation5], %s669
        // Predicated region
        $region37: #{tpu_custom_call.1} parent=31 // pred_check
          %p671 = pneg %p106
        $region38: #{tpu_custom_call.1} parent=31 // pred_check_branch
          %673 = sbr.rel (%p671) target = $region40
        $region39: #{tpu_custom_call.1} parent=31 // pred_region
          %s674 = smul.u32 4, %s20
          %676 = vsyncadd %s667, 0
          %s677 = smul.addr %s674, 8
          %s678 = scalar_lea.hbm %s3, %s677
          %s679 = sshll.u32 %s670, 4
          %s680 = int_to_ptr.vmem [resolvable:$true] %s679
          %s681 = sshll.u32 %s678, 4
          %s682 = int_to_ptr.hbm [resolvable:$true] %s681
          %687 = dma.vmem_to_hbm [thread:$0]  %s680, 1536, %s682, %s667, 512, 1024, 32
        $region40: #{tpu_custom_call.1} parent=31 // pred_fallthru
          _
      $region32: #{tpu_custom_call.1} parent=5 // pred_fallthru
        _
      %p688 = scmp.le.s32.totalorder 2, %s15
      // Predicated region
      $region41: #{tpu_custom_call.1} parent=5 // pred_check
        %p689 = pneg %p688
      $region42: #{tpu_custom_call.1} parent=5 // pred_check_branch
        %691 = sbr.rel (%p689) target = $region44
      $region43: #{tpu_custom_call.1} parent=5 // pred_region
        %s692 = ssub.s32 %s15, 2
        // Predicated region
        $region45: #{tpu_custom_call.1} parent=43 // pred_check
          %p693 = pneg %p112
        $region46: #{tpu_custom_call.1} parent=43 // pred_check_branch
          %695 = sbr.rel (%p693) target = $region48
        $region47: #{tpu_custom_call.1} parent=43 // pred_region
          %s696 = sand.u32 %s97, 1
          %s697 = scalar_lea.sflag [#allocation4], %s696
          %s698 = sand.u32 %s97, 1
          %s699 = smul.addr %s698, 96
          %s700 = scalar_lea.vmem [#allocation5], %s699
          %702 = dma.done %s697, 1536
        $region48: #{tpu_custom_call.1} parent=43 // pred_fallthru
          _
      $region44: #{tpu_custom_call.1} parent=5 // pred_fallthru
        _
    $region6: #{tpu_custom_call.1} parent=1 // loop_footer
      %s19 = sadd.s32 1, %s15
    $region7: #{tpu_custom_call.1} parent=1 // loop_footer_branch
      %14 = sbr.rel target = $region3
    $region8: #{tpu_custom_call.1} parent=1 // loop_exit
      _
    %703 = vsyncpa [#allocation3], 1
    %s704 = scalar_lea.sflag [#allocation3], 1
    %705 = vsyncpa %s704, 1
    %706 = vsyncpa [#allocation4], 1
    %s707 = scalar_lea.sflag [#allocation4], 1
    %708 = vsyncpa %s707, 1

</llo_original>
